<compile_context>
chip_gen: v6e
topology: v6e:2x2x1
jax: 0.10.0
libtpu: 0.0.40
codegen_flags: <defaults>
</compile_context>

<pallas_src>
import jax
import jax.numpy as jnp
from jax.experimental import pallas as pl
from jax.experimental.pallas import tpu as pltpu


def _zip_kernel(w_ref, b_ref, a_ref, out_ref):
    # b_ref: (TO, K), a_ref: (K, TD), w_ref/out_ref: (TO, TD)
    delta = jnp.dot(b_ref[...], a_ref[...], preferred_element_type=jnp.float32)
    out_ref[...] = (w_ref[...].astype(jnp.float32) + delta).astype(out_ref.dtype)


def _pick_tile(n, preferred, align):
    """Largest tile <= preferred that divides n and is a multiple of `align`,
    falling back to the full dimension (always legal for BlockSpec)."""
    if n <= preferred:
        return n
    t = (preferred // align) * align
    while t >= align:
        if n % t == 0:
            return t
        t -= align
    return n


def zip_param_forward(W, A, B, m):
    """W: [o, d], A: [H, r_max, d], B: [H, o, r_max], m: [H, d] -> [o, d]."""
    H, r_max, d = A.shape
    o = B.shape[1]
    K = H * r_max

    # Fold the learned merger vector m into A once, then collapse (H, r) -> K.
    a_flat = (A * m[:, None, :]).reshape(K, d)               # (K, d)
    b_flat = jnp.transpose(B, (1, 0, 2)).reshape(o, K)       # (o, K)

    # Output tiling: lane-dense last dim (multiple of 128 when tiled),
    # sublane-aligned first dim (multiple of 8 when tiled).
    to = _pick_tile(o, 512, 8)
    td = _pick_tile(d, 1024, 128)
    grid = (o // to, d // td)

    itemsize = jnp.dtype(W.dtype).itemsize
    cost = pl.CostEstimate(
        flops=2 * o * d * K,
        transcendentals=0,
        bytes_accessed=(2 * o * d * itemsize            # W read + out write
                        + o * K * b_flat.dtype.itemsize
                        + K * d * a_flat.dtype.itemsize),
    )

    return pl.pallas_call(
        _zip_kernel,
        out_shape=jax.ShapeDtypeStruct((o, d), W.dtype),
        grid=grid,
        in_specs=[
            pl.BlockSpec((to, td), lambda i, j: (i, j)),  # W tile (streamed)
            pl.BlockSpec((to, K), lambda i, j: (i, 0)),   # B_flat rows for tile
            pl.BlockSpec((K, td), lambda i, j: (0, j)),   # A_flat cols for tile
        ],
        out_specs=pl.BlockSpec((to, td), lambda i, j: (i, j)),
        compiler_params=pltpu.CompilerParams(
            dimension_semantics=("parallel", "parallel")),
        cost_estimate=cost,
    )(W, b_flat, a_flat)


def build_zip_param(A_list, B_list, init=0.5):
    """Mirror _ZipParam.__init__: zero-pad each (A_i, B_i) rank to r_max, stack."""
    r_max = max(A.shape[0] for A in A_list)
    A_padded, B_padded = [], []
    for A, B in zip(A_list, B_list):
        r_i, _ = A.shape
        pad = r_max - r_i
        if pad > 0:
            A = jnp.pad(A, ((0, pad), (0, 0)))
            B = jnp.pad(B, ((0, 0), (0, pad)))
        A_padded.append(A)
        B_padded.append(B)
    A_stack = jnp.stack(A_padded)            # (H, r_max, d)
    B_stack = jnp.stack(B_padded)            # (H, o, r_max)
    H, _, d = A_stack.shape
    m = jnp.full((H, d), init, dtype=A_stack.dtype)  # nn.Parameter init
    return A_stack, B_stack, m


if __name__ == "__main__":
    key = jax.random.PRNGKey(0)

    # Small shapes consistent with the module: 3 LoRA adapters with mixed ranks.
    d = 32          # in-features
    o = 16          # out-features
    r_list = [4, 8, 6]

    keys = jax.random.split(key, 2 * len(r_list) + 1)
    A_list = [jax.random.normal(keys[2 * i], (r, d), dtype=jnp.float32)
              for i, r in enumerate(r_list)]
    B_list = [jax.random.normal(keys[2 * i + 1], (o, r), dtype=jnp.float32)
              for i, r in enumerate(r_list)]
    W = jax.random.normal(keys[-1], (o, d), dtype=jnp.float32)

    A, B, m = build_zip_param(A_list, B_list, init=0.5)

    out = zip_param_forward(W, A, B, m)
    out = jax.block_until_ready(out)

    # Pure-JAX reference check (same math as the PyTorch forward).
    A_scaled = A * m[:, None, :]
    delta = jnp.einsum('hor,hrd->hod', B, A_scaled).sum(0)
    ref = W + delta
    assert jnp.allclose(out, ref, atol=1e-4, rtol=1e-4), "mismatch vs reference"

    print("KERNEL_OK")
</pallas_src>

<mosaic_0001>
module attributes {stable_mosaic.version = 11 : i64} {
  func.func @_zip_kernel(%arg0: i32, %arg1: i32, %arg2: memref<16x32xf32, #tpu.memory_space<vmem>>, %arg3: memref<16x24xf32, #tpu.memory_space<vmem>>, %arg4: memref<24x32xf32, #tpu.memory_space<vmem>>, %arg5: memref<16x32xf32, #tpu.memory_space<vmem>>) attributes {dimension_semantics = [#tpu.dimension_semantics<parallel>, #tpu.dimension_semantics<parallel>], iteration_bounds = array<i64: 1, 1>, scalar_prefetch = 0 : i64, scratch_operands = 0 : i64, tpu.core_type = #tpu.core_type<tc>, window_params = [{transform_indices = @transform_0, window_bounds = array<i64: 16, 32>}, {transform_indices = @transform_1, window_bounds = array<i64: 16, 24>}, {transform_indices = @transform_2, window_bounds = array<i64: 24, 32>}, {transform_indices = @transform_3, window_bounds = array<i64: 16, 32>}]} {
    %c0 = arith.constant 0 : index
    %c0_0 = arith.constant 0 : index
    %0 = vector.load %arg3[%c0, %c0_0] : memref<16x24xf32, #tpu.memory_space<vmem>>, vector<16x24xf32>
    %c0_1 = arith.constant 0 : index
    %c0_2 = arith.constant 0 : index
    %1 = vector.load %arg4[%c0_1, %c0_2] : memref<24x32xf32, #tpu.memory_space<vmem>>, vector<24x32xf32>
    %cst = arith.constant dense<0.000000e+00> : vector<16x32xf32>
    %2 = tpu.matmul %0, %1, %cst {dimension_numbers = #tpu.dot_dimension_numbers<[1], [0], [0], [1], [0, 0, 1, 1], [], []>} : vector<16x24xf32>, vector<24x32xf32>, vector<16x32xf32> -> vector<16x32xf32>
    %c0_3 = arith.constant 0 : index
    %c0_4 = arith.constant 0 : index
    %3 = vector.load %arg2[%c0_3, %c0_4] : memref<16x32xf32, #tpu.memory_space<vmem>>, vector<16x32xf32>
    %4 = arith.addf %3, %2 : vector<16x32xf32>
    %c0_5 = arith.constant 0 : index
    %c0_6 = arith.constant 0 : index
    %5 = vector.load %arg5[%c0_5, %c0_6] : memref<16x32xf32, #tpu.memory_space<vmem>>, vector<16x32xf32>
    tpu.vector_store %arg5[%c0_5, %c0_6], %4 {strides = array<i32>} : memref<16x32xf32, #tpu.memory_space<vmem>>, vector<16x32xf32>,
    return
  }
  func.func @transform_0(%arg0: i32, %arg1: i32) -> (i32, i32) {
    %c0_i32 = arith.constant 0 : i32
    return %arg0, %arg1 : i32, i32
  }
  func.func @transform_1(%arg0: i32, %arg1: i32) -> (i32, i32) {
    %c0_i32 = arith.constant 0 : i32
    %c0_i32_0 = arith.constant 0 : i32
    return %arg0, %c0_i32 : i32, i32
  }
  func.func @transform_2(%arg0: i32, %arg1: i32) -> (i32, i32) {
    %c0_i32 = arith.constant 0 : i32
    %c0_i32_0 = arith.constant 0 : i32
    return %c0_i32, %arg1 : i32, i32
  }
  func.func @transform_3(%arg0: i32, %arg1: i32) -> (i32, i32) {
    %c0_i32 = arith.constant 0 : i32
    return %arg0, %arg1 : i32, i32
  }
}

</mosaic_0001>

<llo_original>
// kernel: tpu_custom_call.1
$region0: #{tpu_custom_call.1}
  #allocation0 [shape = 'u32[]', space=smem, size = 0x4, offset = 0x4, fixed_abs, tag = 'smem constant byte address 0x4 - core index']
  #allocation1 [shape = 'u32[144,128]{1,0:T(1,128)}', space=vmem, size = 0x12000, scoped, tag = 'internal scratch']
  %s0 = inlined_call_operand.hbm [shape: f32[16,32], index: 0, kind: input, shape index: {}]
  %s1 = inlined_call_operand.hbm [shape: f32[16,24], index: 1, kind: input, shape index: {}]
  %s2 = inlined_call_operand.hbm [shape: f32[24,32], index: 2, kind: input, shape index: {}]
  %s3 = inlined_call_operand.hbm [shape: f32[16,32], index: 3, kind: output, shape index: {}]
  %s4 = sld [smem:[#allocation0]]
  $region34: #{tpu_custom_call.1} parent=0
    _
  %s6 = ssub.s32 1, %s4
  %s7 = scalar_select 0, %s6, %s4
  $region1: #{tpu_custom_call.1} parent=0
    #allocation2 [shape = 'u8[8192]{0}', space=vmem, size = 0x2000, scoped, tag = 'input window, operand 0, single buffered']
    #allocation3 [shape = 's32[1]{0}', space=sflag, size = 0x4, scoped, tag = 'scoped memory for tpu_custom_call.1']
    #allocation4 [shape = 's32[1]{0}', space=sflag, size = 0x4, scoped, tag = 'scoped memory for tpu_custom_call.1']
    #allocation5 [shape = 'u8[8192]{0}', space=vmem, size = 0x2000, scoped, tag = 'input window, operand 1, single buffered']
    #allocation6 [shape = 's32[1]{0}', space=sflag, size = 0x4, scoped, tag = 'scoped memory for tpu_custom_call.1']
    #allocation7 [shape = 'u8[12288]{0}', space=vmem, size = 0x3000, scoped, tag = 'input window, operand 2, single buffered']
    #allocation8 [shape = 'u8[8192]{0}', space=vmem, size = 0x2000, scoped, tag = 'output window, operand 0, single buffered']
    %8 = vsyncpa [#allocation3], 0
    %9 = vsyncpa [#allocation6], 0
    %10 = vsyncpa [#allocation4], 0
    // Predicated region
    $region2: #{tpu_custom_call.1} parent=1 // pred_check
      _
    $region3: #{tpu_custom_call.1} parent=1 // pred_check_branch
      %12 = sbr.rel (0) target = $region5
    $region4: #{tpu_custom_call.1} parent=1 // pred_region
      %s14 = ssub.s32 256, 256
      %15 = vsyncadd [#allocation3], %s14
      %s16 = sshll.u32 [#allocation2], 4
      %s17 = int_to_ptr.vmem [resolvable:$true] %s16
      %22 = dma.hbm_to_vmem [thread:$0]  %s0, 256, %s17, [#allocation3], 128, 128, 8
    $region5: #{tpu_custom_call.1} parent=1 // pred_fallthru
      _
    // Predicated region
    $region6: #{tpu_custom_call.1} parent=1 // pred_check
      _
    $region7: #{tpu_custom_call.1} parent=1 // pred_check_branch
      %24 = sbr.rel (0) target = $region9
    $region8: #{tpu_custom_call.1} parent=1 // pred_region
      %s26 = ssub.s32 256, 256
      %27 = vsyncadd [#allocation6], %s26
      %s28 = sshll.u32 [#allocation5], 4
      %s29 = int_to_ptr.vmem [resolvable:$true] %s28
      %34 = dma.hbm_to_vmem [thread:$0]  %s1, 256, %s29, [#allocation6], 128, 128, 8
    $region9: #{tpu_custom_call.1} parent=1 // pred_fallthru
      _
    // Predicated region
    $region10: #{tpu_custom_call.1} parent=1 // pred_check
      _
    $region11: #{tpu_custom_call.1} parent=1 // pred_check_branch
      %36 = sbr.rel (0) target = $region13
    $region12: #{tpu_custom_call.1} parent=1 // pred_region
      %s38 = ssub.s32 384, 384
      %39 = vsyncadd [#allocation6], %s38
      %s40 = sshll.u32 [#allocation7], 4
      %s41 = int_to_ptr.vmem [resolvable:$true] %s40
      %46 = dma.hbm_to_vmem [thread:$0]  %s2, 384, %s41, [#allocation6], 128, 128, 8
    $region13: #{tpu_custom_call.1} parent=1 // pred_fallthru
      _
    // Predicated region
    $region14: #{tpu_custom_call.1} parent=1 // pred_check
      _
    $region15: #{tpu_custom_call.1} parent=1 // pred_check_branch
      %48 = sbr.rel (0) target = $region17
    $region16: #{tpu_custom_call.1} parent=1 // pred_region
      %49 = dma.done [#allocation3], 256
    $region17: #{tpu_custom_call.1} parent=1 // pred_fallthru
      _
    // Predicated region
    $region18: #{tpu_custom_call.1} parent=1 // pred_check
      _
    $region19: #{tpu_custom_call.1} parent=1 // pred_check_branch
      %51 = sbr.rel (0) target = $region21
    $region20: #{tpu_custom_call.1} parent=1 // pred_region
      %52 = dma.done [#allocation6], 256
    $region21: #{tpu_custom_call.1} parent=1 // pred_fallthru
      _
    // Predicated region
    $region22: #{tpu_custom_call.1} parent=1 // pred_check
      _
    $region23: #{tpu_custom_call.1} parent=1 // pred_check_branch
      %54 = sbr.rel (0) target = $region25
    $region24: #{tpu_custom_call.1} parent=1 // pred_region
      %55 = dma.done [#allocation6], 384
    $region25: #{tpu_custom_call.1} parent=1 // pred_fallthru
      _
    %v56 = vld [vmem:[#allocation5] sm:$0xff]
    %v57 = vld [vmem:[#allocation5 + $0x8] sm:$0xff]
    %v58 = vld [vmem:[#allocation7] sm:$0xff]
    %v59 = vld [vmem:[#allocation7 + $0x8] sm:$0xff]
    %v60 = vld [vmem:[#allocation7 + $0x10] sm:$0xff]
    %vm61 = vcmask 195584
    %v63 = vsel %vm61, %v56, 0
    %v66 = vsel %vm61, %v57, 0
    %68 = vmatprep.subr.mxu0 0.0
    %69 = vmatpush1.msra.mxu0 0.0
    %70 = vmatprep.subr.mxu0 0.0
    %71 = vmatpush1.msra.mxu0 0.0
    %72 = vmatprep.subr.mxu0 0.0
    %73 = vmatpush1.msra.mxu0 0.0
    %74 = vmatprep.subr.mxu0 0.0
    %75 = vmatpush1.msra.mxu0 0.0
    %76 = vmatprep.subr.mxu0 0.0
    %77 = vmatpush1.msra.mxu0 0.0
    %78 = vmatprep.subr.mxu0 0.0
    %79 = vmatpush1.msra.mxu0 0.0
    %80 = vmatprep.subr.mxu0 0.0
    %81 = vmatpush1.msra.mxu0 0.0
    %82 = vmatprep.subr.mxu0 0.0
    %83 = vmatpush1.msra.mxu0 0.0
    %84 = vmatprep.subr.mxu0 0.0
    %85 = vmatpush1.msra.mxu0 0.0
    %86 = vmatprep.subr.mxu0 0.0
    %87 = vmatpush1.msra.mxu0 0.0
    %88 = vmatprep.subr.mxu0 0.0
    %89 = vmatpush1.msra.mxu0 0.0
    %90 = vmatprep.subr.mxu0 0.0
    %91 = vmatpush1.msra.mxu0 0.0
    %92 = vmatprep.subr.mxu0 0.0
    %93 = vmatpush1.msra.mxu0 0.0
    %94 = vmatprep.subr.mxu0 0.0
    %95 = vmatpush1.msra.mxu0 %v60
    %96 = vmatprep.subr.mxu0 0.0
    %97 = vmatpush1.msra.mxu0 %v59
    %98 = vmatprep.subr.mxu0 0.0
    %99 = vmatpush1.msra.mxu0 %v58
    %100 = vmatprep.subr.mxu0 0.0
    %101 = vmatpush2.msra.mxu0 0.0
    %102 = vmatprep.subr.mxu0 0.0
    %103 = vmatpush2.msra.mxu0 0.0
    %104 = vmatprep.subr.mxu0 0.0
    %105 = vmatpush2.msra.mxu0 0.0
    %106 = vmatprep.subr.mxu0 0.0
    %107 = vmatpush2.msra.mxu0 0.0
    %108 = vmatprep.subr.mxu0 0.0
    %109 = vmatpush2.msra.mxu0 0.0
    %110 = vmatprep.subr.mxu0 0.0
    %111 = vmatpush2.msra.mxu0 0.0
    %112 = vmatprep.subr.mxu0 0.0
    %113 = vmatpush2.msra.mxu0 0.0
    %114 = vmatprep.subr.mxu0 0.0
    %115 = vmatpush2.msra.mxu0 0.0
    %116 = vmatprep.subr.mxu0 0.0
    %117 = vmatpush2.msra.mxu0 0.0
    %118 = vmatprep.subr.mxu0 0.0
    %119 = vmatpush2.msra.mxu0 0.0
    %120 = vmatprep.subr.mxu0 0.0
    %121 = vmatpush2.msra.mxu0 0.0
    %122 = vmatprep.subr.mxu0 0.0
    %123 = vmatpush2.msra.mxu0 0.0
    %124 = vmatprep.subr.mxu0 0.0
    %125 = vmatpush2.msra.mxu0 0.0
    %126 = vmatprep.subr.mxu0 0.0
    %127 = vmatpush2.msra.mxu0 0.0
    %128 = vmatprep.subr.mxu0 0.0
    %129 = vmatpush2.msra.mxu0 0.0
    %130 = vmatprep.subr.mxu0 0.0
    %131 = vmatpush2.msra.mxu0 0.0
    %132 = vmatprep.mubr.f32.mxu0 0.0
    %133 = vmatmul.mubr.f32.gmra.mxu0 %v63
    %v134 = vpop.f32.mrf.mxu0
    %v135 = vadd.f32 0.0, %v134
    %v136 = vpop.f32.mrf.mxu0
    %137 = vmatprep.mubr.f32.mxu0 0.0
    %138 = vmatmul.mubr.f32.gmra.mxu0 %v66
    %v139 = vpop.f32.mrf.mxu0
    %v140 = vadd.f32 0.0, %v139
    %v141 = vpop.f32.mrf.mxu0
    %142 = vdwg.mxu0
    %v143 = vld [vmem:[#allocation2] sm:$0xff]
    %v144 = vld [vmem:[#allocation2 + $0x8] sm:$0xff]
    %v145 = vadd.f32 %v143, %v135
    %v146 = vadd.f32 %v144, %v140
    %vm147 = vcmask 261120
    %148 = vst.msk [vmem:[#allocation8] sm:$0xff] %vm147, %v145
    %149 = vst.msk [vmem:[#allocation8 + $0x8] sm:$0xff] %vm147, %v146
    // Predicated region
    $region26: #{tpu_custom_call.1} parent=1 // pred_check
      _
    $region27: #{tpu_custom_call.1} parent=1 // pred_check_branch
      %151 = sbr.rel (0) target = $region29
    $region28: #{tpu_custom_call.1} parent=1 // pred_region
      %s153 = ssub.s32 256, 256
      %154 = vsyncadd [#allocation4], %s153
      %s155 = sshll.u32 [#allocation8], 4
      %s156 = int_to_ptr.vmem [resolvable:$true] %s155
      %161 = dma.vmem_to_hbm [thread:$0]  %s156, 256, %s3, [#allocation4], 128, 128, 8
    $region29: #{tpu_custom_call.1} parent=1 // pred_fallthru
      _
    // Predicated region
    $region30: #{tpu_custom_call.1} parent=1 // pred_check
      _
    $region31: #{tpu_custom_call.1} parent=1 // pred_check_branch
      %163 = sbr.rel (0) target = $region33
    $region32: #{tpu_custom_call.1} parent=1 // pred_region
      %164 = dma.done [#allocation4], 256
    $region33: #{tpu_custom_call.1} parent=1 // pred_fallthru
      _
    %165 = vsyncpa [#allocation3], 1
    %166 = vsyncpa [#allocation6], 1
    %167 = vsyncpa [#allocation4], 1

</llo_original>
